<compile_context>
chip_gen: v6e
topology: v6e:2x2x1
jax: 0.10.0
libtpu: 0.0.40
codegen_flags: <defaults>
</compile_context>

<pallas_src>
import functools

import jax
import jax.numpy as jnp
from jax.experimental import pallas as pl
from jax.experimental.pallas import tpu as pltpu

_LANE = 128
_SUBLANE = 8


def _round_up(x, m):
    return ((x + m - 1) // m) * m


def _vmem_capacity_bytes():
    try:
        return int(pltpu.get_tpu_info().vmem_capacity_bytes)
    except Exception:
        return 64 << 20  # conservative (v7x-sized) default


def _vmem_row_cost_bytes(c, itemsize):
    """Per-row VMEM cost, counting padded layouts."""
    c_pad = _round_up(c, _LANE)
    cost = 2 * c_pad * itemsize            # logits block, double-buffered
    cost += 2 * _LANE * 4                  # (tn,1) i32 targets block, lane-padded, double-buffered
    cost += 6 * c_pad * 4                  # ~6 live (tn, C) f32 temporaries
    cost += 12 * (_LANE * 4) // _SUBLANE   # ~12 (tn, 1) per-row vectors (512 B / 8 rows each)
    return cost


def _choose_tile_rows(n, c, itemsize, vmem_budget):
    """Largest 32-aligned tile height fitting the padded-VMEM budget; prefer divisors of n."""
    if n <= 32:
        return n
    row_cost = _vmem_row_cost_bytes(c, itemsize)
    c_pad = _round_up(c, _LANE)
    resident = 2 * _round_up(c, _SUBLANE) * c_pad * 4      # resident (C, C) weights
    budget = max(vmem_budget - resident - (2 << 20), 2 << 20)
    tn = max(32, (int(budget // row_cost) // 32) * 32)
    if tn >= n:
        return n
    # Prefer a 32-aligned divisor of n near the cap -> no partial tile at all.
    d = tn
    while d >= max(32, tn // 2):
        if n % d == 0:
            return d
        d -= 32
    return tn


def focal_loss_kernel(x_ref, t_ref, w_ref, out_ref, acc_ref, *,
                      gamma, n_total, tile_rows, tiles_per_split, needs_mask):
    c_ax = pl.program_id(0)      # reduction split (one per v7x TensorCore)
    i = pl.program_id(1)         # batch tile within this split

    @pl.when(i == 0)
    def _init():
        acc_ref[...] = jnp.zeros_like(acc_ref)

    x = x_ref[...].astype(jnp.float32)     # (TN, C) logits, upcast in-kernel
    t = t_ref[...]                         # (TN, 1) int32 targets
    TN, C = x.shape

    col = jax.lax.broadcasted_iota(jnp.int32, (TN, C), 1)
    onehot_t = col == t                    # (TN, C) bool one-hot(targets)

    # --- softmax stats via log-sum-exp (no full softmax materialized) ---
    m = jnp.max(x, axis=-1, keepdims=True)                               # (TN, 1)
    sum_e = jnp.sum(jnp.exp(x - m), axis=-1, keepdims=True)              # (TN, 1)
    x_t = jnp.sum(jnp.where(onehot_t, x, 0.0), axis=-1, keepdims=True)   # (TN, 1)
    log_p = (x_t - m) - jnp.log(sum_e)                                   # (TN, 1)
    probs = jnp.exp(log_p)                                               # (TN, 1)

    # argmax over logits (softmax monotone); first-occurrence tie-break like jnp.argmax.
    pred = jnp.min(jnp.where(x == m, col, C), axis=-1, keepdims=True)    # (TN, 1)

    # (alpha*weights)[targets, pred] via one-hot row-gather on the MXU.  The
    # mask dtype follows the resident weights dtype (bf16 => single MXU pass).
    w_rows = jnp.dot(onehot_t.astype(w_ref.dtype), w_ref[...],
                     preferred_element_type=jnp.float32)                 # (TN, C)
    sel_aw = jnp.sum(jnp.where(col == pred, w_rows, 0.0),
                     axis=-1, keepdims=True)                             # (TN, 1)

    # focal term (1 - p)^gamma, specialized for small integer gamma (VPU-only).
    q = 1.0 - probs
    g_int = int(gamma)
    if float(gamma) == float(g_int) and 0 <= g_int <= 8:
        focal = jnp.ones_like(q)
        for _ in range(g_int):
            focal = focal * q
    else:
        focal = jnp.exp(gamma * jnp.log(q))      # EUP path for non-integer gamma

    batch_loss = -(sel_aw * focal * log_p)       # (TN, 1); alpha already folded in

    if needs_mask:
        # Only the last (partial) tile has out-of-range rows.  A select never
        # propagates NaN/Inf from its unselected branch, so this cheap (TN,1)
        # mask is sufficient — no (TN, C) scrub of x needed.
        tile_idx = c_ax * tiles_per_split + i
        row = jax.lax.broadcasted_iota(jnp.int32, (TN, 1), 0) + tile_idx * tile_rows
        batch_loss = jnp.where(row < n_total, batch_loss, 0.0)

    acc_ref[...] += jnp.sum(batch_loss)

    @pl.when(i == pl.num_programs(1) - 1)
    def _finalize():
        out_ref[...] = acc_ref[...]


def focal_loss_reweight(logits, targets, alpha, weights, gamma=2.0,
                        size_average=True, tile_rows=None, precise_weights=True):
    """logits: (N, C) f32/bf16; targets: (N,) int; alpha: (C,1) or (C,); weights: (C, C)."""
    N, C = logits.shape
    t2 = targets.reshape(N, 1).astype(jnp.int32)

    # Fold alpha into the weights on the host (pure algebra; saves a resident
    # input, one (tn,C) multiply and one cross-lane reduction per tile).
    aw = alpha.reshape(C, 1).astype(jnp.float32) * weights.astype(jnp.float32)
    if not precise_weights:
        aw = aw.astype(jnp.bfloat16)      # single-pass MXU row gather (~0.4% rel. err.)

    itemsize = jnp.dtype(logits.dtype).itemsize
    vmem_cap = _vmem_capacity_bytes()
    vmem_budget = min(int(vmem_cap * 3 // 4), 100 << 20)   # ~48 MiB v7x, ~96 MiB v5e/v6e

    tn = int(tile_rows) if tile_rows is not None else _choose_tile_rows(
        N, C, itemsize, vmem_budget)
    tn = max(1, min(tn, N))

    n_tiles = pl.cdiv(N, tn)
    if tile_rows is None and n_tiles > 1 and n_tiles % 2 == 1:
        # Nudge to an even tile count so the reduction splits cleanly across
        # v7x's two TensorCores (a no-op loop split on 1-TC parts).
        alt = _round_up(pl.cdiv(N, n_tiles + 1), 32)
        if 32 <= alt <= tn and pl.cdiv(N, alt) % 2 == 0:
            tn, n_tiles = alt, pl.cdiv(N, alt)

    num_splits = 2 if (n_tiles >= 2 and n_tiles % 2 == 0) else 1
    tiles_per_split = n_tiles // num_splits
    needs_mask = (N % tn) != 0

    # Padded-layout VMEM estimate (inputs + temporaries + resident weights + slack).
    w_itemsize = jnp.dtype(aw.dtype).itemsize
    c_pad = _round_up(C, _LANE)
    vmem_est = (_vmem_row_cost_bytes(C, itemsize) * tn
                + 2 * _round_up(C, _SUBLANE) * c_pad * w_itemsize
                + (2 << 20))
    vmem_limit = int(min(max(vmem_est, 16 << 20), vmem_budget))

    kernel = functools.partial(
        focal_loss_kernel,
        gamma=float(gamma),
        n_total=int(N),
        tile_rows=int(tn),
        tiles_per_split=int(tiles_per_split),
        needs_mask=bool(needs_mask),
    )

    row_block = lambda c, i: (c * tiles_per_split + i, 0)

    partials = pl.pallas_call(
        kernel,
        out_shape=jax.ShapeDtypeStruct((num_splits, 1, 1), jnp.float32),
        grid_spec=pltpu.PrefetchScalarGridSpec(
            num_scalar_prefetch=0,
            grid=(num_splits, tiles_per_split),
            in_specs=[
                pl.BlockSpec((tn, C), row_block),             # logits tile (native dtype)
                pl.BlockSpec((tn, 1), row_block),             # targets tile
                pl.BlockSpec((C, C), lambda c, i: (0, 0)),    # alpha*weights (resident)
            ],
            out_specs=pl.BlockSpec((1, 1, 1), lambda c, i: (c, 0, 0)),
            scratch_shapes=[pltpu.VMEM((1, 1, 1), jnp.float32)],
        ),
        compiler_params=pltpu.CompilerParams(
            dimension_semantics=("parallel", "arbitrary"),
            vmem_limit_bytes=vmem_limit,
        ),
    )(logits, t2, aw)

    total = jnp.sum(partials)
    if size_average:
        total = total / jnp.float32(N)
    return total


def focal_loss_reweight_ref(logits, targets, alpha, weights, gamma=2.0, size_average=True):
    """Pure-JAX reference mirroring the PyTorch module."""
    N, C = logits.shape
    P = jax.nn.softmax(logits.astype(jnp.float32), axis=-1)
    mask = jax.nn.one_hot(targets, C, dtype=P.dtype)
    probs = jnp.sum(P * mask, axis=1, keepdims=True)
    log_p = jnp.log(probs)
    pred = jnp.argmax(P, axis=-1)
    a = alpha.reshape(-1)[targets].reshape(-1, 1)
    sw = weights[targets, pred].reshape(-1, 1)
    batch_loss = -a * jnp.power(1.0 - probs, gamma) * log_p * sw
    return jnp.mean(batch_loss) if size_average else jnp.sum(batch_loss)


if __name__ == "__main__":
    key = jax.random.PRNGKey(0)
    k1, k2, k3, k4 = jax.random.split(key, 4)

    C = 16
    alpha = jax.random.uniform(k3, (C, 1), dtype=jnp.float32, minval=0.5, maxval=1.5)
    weights = jax.random.uniform(k4, (C, C), dtype=jnp.float32, minval=0.5, maxval=2.0)

    # Case 1: small single tile, mean reduction (auto tile chooser path).
    N = 8
    logits = jax.random.normal(k1, (N, C), dtype=jnp.float32)
    targets = jax.random.randint(k2, (N,), 0, C, dtype=jnp.int32)
    out = jax.block_until_ready(focal_loss_reweight(logits, targets, alpha, weights))
    ref = focal_loss_reweight_ref(logits, targets, alpha, weights)
    assert jnp.allclose(out, ref, rtol=1e-5, atol=1e-6), (out, ref)

    # Case 2: partial last tile (N=20, tile_rows=8) + sum reduction -> masking path.
    N2 = 20
    logits2 = jax.random.normal(k1, (N2, C), dtype=jnp.float32)
    targets2 = jax.random.randint(k2, (N2,), 0, C, dtype=jnp.int32)
    out2 = jax.block_until_ready(
        focal_loss_reweight(logits2, targets2, alpha, weights,
                            size_average=False, tile_rows=8))
    ref2 = focal_loss_reweight_ref(logits2, targets2, alpha, weights, size_average=False)
    assert jnp.allclose(out2, ref2, rtol=1e-5, atol=1e-5), (out2, ref2)

    # Case 3: even tile count (N=64, tile_rows=16) -> exercises the 2-way
    # reduction split ("parallel" leading axis) with bf16 logits on the wire.
    N3 = 64
    logits3 = jax.random.normal(k1, (N3, C), dtype=jnp.float32).astype(jnp.bfloat16)
    targets3 = jax.random.randint(k2, (N3,), 0, C, dtype=jnp.int32)
    out3 = jax.block_until_ready(
        focal_loss_reweight(logits3, targets3, alpha, weights, tile_rows=16))
    ref3 = focal_loss_reweight_ref(logits3, targets3, alpha, weights)
    assert jnp.allclose(out3, ref3, rtol=1e-4, atol=1e-4), (out3, ref3)

    # Case 4: non-integer gamma + single-pass bf16 MXU row gather.
    out4 = jax.block_until_ready(
        focal_loss_reweight(logits, targets, alpha, weights, gamma=1.5,
                            precise_weights=False))
    ref4 = focal_loss_reweight_ref(logits, targets, alpha, weights, gamma=1.5)
    assert jnp.allclose(out4, ref4, rtol=2e-2, atol=2e-2), (out4, ref4)

    print("KERNEL_OK")
</pallas_src>

<mosaic_0001>
module attributes {stable_mosaic.version = 11 : i64} {
  func.func @focal_loss_kernel(%arg0: i32, %arg1: i32, %arg2: memref<8x16xf32, #tpu.memory_space<vmem>>, %arg3: memref<8x1xi32, #tpu.memory_space<vmem>>, %arg4: memref<16x16xf32, #tpu.memory_space<vmem>>, %arg5: memref<1x1x1xf32, #tpu.memory_space<vmem>>, %arg6: memref<1x1x1xf32, #tpu.memory_space<vmem>>) attributes {dimension_semantics = [#tpu.dimension_semantics<parallel>, #tpu.dimension_semantics<arbitrary>], iteration_bounds = array<i64: 1, 1>, scalar_prefetch = 0 : i64, scratch_operands = 1 : i64, tpu.core_type = #tpu.core_type<tc>, window_params = [{transform_indices = @transform_0, window_bounds = array<i64: 8, 16>}, {transform_indices = @transform_1, window_bounds = array<i64: 8, 1>}, {pipeline_mode = #tpu.pipeline_mode<synchronous>, transform_indices = @transform_2, window_bounds = array<i64: 16, 16>}, {transform_indices = @transform_3, window_bounds = array<i64: 1, 1, 1>}]} {
    %c0_i32 = arith.constant 0 : i32
    %0 = arith.cmpi eq, %arg1, %c0_i32 : i32
    %1 = arith.extui %0 : i1 to i32
    %c0_i32_0 = arith.constant 0 : i32
    %2 = arith.cmpi ne, %1, %c0_i32_0 : i32
    scf.if %2 {
      %cst_25 = arith.constant 0.000000e+00 : f32
      %59 = vector.broadcast %cst_25 : f32 to vector<1x1x1xf32>
      %c0_26 = arith.constant 0 : index
      %c0_27 = arith.constant 0 : index
      %c0_28 = arith.constant 0 : index
      %60 = vector.load %arg6[%c0_26, %c0_27, %c0_28] : memref<1x1x1xf32, #tpu.memory_space<vmem>>, vector<1x1x1xf32>
      tpu.vector_store %arg6[%c0_26, %c0_27, %c0_28], %59 {strides = array<i32>} : memref<1x1x1xf32, #tpu.memory_space<vmem>>, vector<1x1x1xf32>,
    } else {
    }
    %c0 = arith.constant 0 : index
    %c0_1 = arith.constant 0 : index
    %3 = vector.load %arg2[%c0, %c0_1] : memref<8x16xf32, #tpu.memory_space<vmem>>, vector<8x16xf32>
    %c0_2 = arith.constant 0 : index
    %c0_3 = arith.constant 0 : index
    %4 = vector.load %arg3[%c0_2, %c0_3] : memref<8x1xi32, #tpu.memory_space<vmem>>, vector<8x1xi32>
    %5 = tpu.iota {dimensions = array<i32: 1>} : vector<8x16xi32>
    %6 = vector.broadcast %4 : vector<8x1xi32> to vector<8x16xi32>
    %7 = arith.cmpi eq, %5, %6 : vector<8x16xi32>
    %cst = arith.constant dense<0xFF800000> : vector<8xf32>
    %8 = vector.multi_reduction <maximumf>, %3, %cst [1] : vector<8x16xf32> to vector<8xf32>
    %9 = vector.shape_cast %8 : vector<8xf32> to vector<8x1xf32>
    %10 = vector.broadcast %9 : vector<8x1xf32> to vector<8x16xf32>
    %11 = arith.subf %3, %10 : vector<8x16xf32>
    %12 = math.exp %11 : vector<8x16xf32>
    %cst_4 = arith.constant dense<0.000000e+00> : vector<8xf32>
    %13 = vector.multi_reduction <add>, %12, %cst_4 [1] : vector<8x16xf32> to vector<8xf32>
    %14 = vector.shape_cast %13 : vector<8xf32> to vector<8x1xf32>
    %cst_5 = arith.constant 0.000000e+00 : f32
    %15 = vector.broadcast %cst_5 : f32 to vector<8x16xf32>
    %16 = arith.select %7, %3, %15 : vector<8x16xi1>, vector<8x16xf32>
    %cst_6 = arith.constant dense<0.000000e+00> : vector<8xf32>
    %17 = vector.multi_reduction <add>, %16, %cst_6 [1] : vector<8x16xf32> to vector<8xf32>
    %18 = vector.shape_cast %17 : vector<8xf32> to vector<8x1xf32>
    %19 = arith.subf %18, %9 : vector<8x1xf32>
    %20 = math.log %14 : vector<8x1xf32>
    %21 = arith.subf %19, %20 : vector<8x1xf32>
    %22 = math.exp %21 : vector<8x1xf32>
    %23 = vector.broadcast %9 : vector<8x1xf32> to vector<8x16xf32>
    %24 = arith.cmpf oeq, %3, %23 : vector<8x16xf32>
    %c16_i32 = arith.constant 16 : i32
    %25 = vector.broadcast %c16_i32 : i32 to vector<8x16xi32>
    %26 = arith.select %24, %5, %25 : vector<8x16xi1>, vector<8x16xi32>
    %cst_7 = arith.constant dense<2147483647> : vector<8xi32>
    %27 = vector.multi_reduction <minsi>, %26, %cst_7 [1] : vector<8x16xi32> to vector<8xi32>
    %28 = vector.shape_cast %27 : vector<8xi32> to vector<8x1xi32>
    %29 = arith.extui %7 : vector<8x16xi1> to vector<8x16xi32>
    %30 = arith.sitofp %29 : vector<8x16xi32> to vector<8x16xf32>
    %c0_8 = arith.constant 0 : index
    %c0_9 = arith.constant 0 : index
    %31 = vector.load %arg4[%c0_8, %c0_9] : memref<16x16xf32, #tpu.memory_space<vmem>>, vector<16x16xf32>
    %cst_10 = arith.constant dense<0.000000e+00> : vector<8x16xf32>
    %32 = tpu.matmul %30, %31, %cst_10 {dimension_numbers = #tpu.dot_dimension_numbers<[1], [0], [0], [1], [0, 0, 1, 1], [], []>} : vector<8x16xf32>, vector<16x16xf32>, vector<8x16xf32> -> vector<8x16xf32>
    %33 = vector.broadcast %28 : vector<8x1xi32> to vector<8x16xi32>
    %34 = arith.cmpi eq, %5, %33 : vector<8x16xi32>
    %cst_11 = arith.constant 0.000000e+00 : f32
    %35 = vector.broadcast %cst_11 : f32 to vector<8x16xf32>
    %36 = arith.select %34, %32, %35 : vector<8x16xi1>, vector<8x16xf32>
    %cst_12 = arith.constant dense<0.000000e+00> : vector<8xf32>
    %37 = vector.multi_reduction <add>, %36, %cst_12 [1] : vector<8x16xf32> to vector<8xf32>
    %38 = vector.shape_cast %37 : vector<8xf32> to vector<8x1xf32>
    %cst_13 = arith.constant 1.000000e+00 : f32
    %39 = vector.broadcast %cst_13 : f32 to vector<8x1xf32>
    %40 = arith.subf %39, %22 : vector<8x1xf32>
    %cst_14 = arith.constant 1.000000e+00 : f32
    %41 = vector.broadcast %cst_14 : f32 to vector<8x1xf32>
    %42 = arith.mulf %41, %40 : vector<8x1xf32>
    %43 = arith.mulf %42, %40 : vector<8x1xf32>
    %44 = arith.mulf %38, %43 : vector<8x1xf32>
    %45 = arith.mulf %44, %21 : vector<8x1xf32>
    %cst_15 = arith.constant 0.000000e+00 : f32
    %46 = vector.broadcast %cst_15 : f32 to vector<8x1xf32>
    %47 = arith.subf %46, %45 : vector<8x1xf32>
    %c0_16 = arith.constant 0 : index
    %c0_17 = arith.constant 0 : index
    %c0_18 = arith.constant 0 : index
    %48 = vector.load %arg6[%c0_16, %c0_17, %c0_18] : memref<1x1x1xf32, #tpu.memory_space<vmem>>, vector<1x1x1xf32>
    %49 = vector.shape_cast %47 : vector<8x1xf32> to vector<1x8x1xf32>
    %cst_19 = arith.constant dense<0.000000e+00> : vector<1xf32>
    %50 = vector.multi_reduction <add>, %49, %cst_19 [1, 2] : vector<1x8x1xf32> to vector<1xf32>
    %51 = vector.shape_cast %50 : vector<1xf32> to vector<1x1x1xf32>
    %52 = vector.extract %51[0, 0, 0] : f32 from vector<1x1x1xf32>
    %53 = vector.broadcast %52 : f32 to vector<1x1x1xf32>
    %54 = arith.addf %48, %53 : vector<1x1x1xf32>
    %c0_20 = arith.constant 0 : index
    %c0_21 = arith.constant 0 : index
    %c0_22 = arith.constant 0 : index
    %55 = vector.load %arg6[%c0_20, %c0_21, %c0_22] : memref<1x1x1xf32, #tpu.memory_space<vmem>>, vector<1x1x1xf32>
    tpu.vector_store %arg6[%c0_20, %c0_21, %c0_22], %54 {strides = array<i32>} : memref<1x1x1xf32, #tpu.memory_space<vmem>>, vector<1x1x1xf32>,
    %c0_i32_23 = arith.constant 0 : i32
    %56 = arith.cmpi eq, %arg1, %c0_i32_23 : i32
    %57 = arith.extui %56 : i1 to i32
    %c0_i32_24 = arith.constant 0 : i32
    %58 = arith.cmpi ne, %57, %c0_i32_24 : i32
    scf.if %58 {
      %c0_25 = arith.constant 0 : index
      %c0_26 = arith.constant 0 : index
      %c0_27 = arith.constant 0 : index
      %59 = vector.load %arg6[%c0_25, %c0_26, %c0_27] : memref<1x1x1xf32, #tpu.memory_space<vmem>>, vector<1x1x1xf32>
      %c0_28 = arith.constant 0 : index
      %c0_29 = arith.constant 0 : index
      %c0_30 = arith.constant 0 : index
      %60 = vector.load %arg5[%c0_28, %c0_29, %c0_30] : memref<1x1x1xf32, #tpu.memory_space<vmem>>, vector<1x1x1xf32>
      tpu.vector_store %arg5[%c0_28, %c0_29, %c0_30], %59 {strides = array<i32>} : memref<1x1x1xf32, #tpu.memory_space<vmem>>, vector<1x1x1xf32>,
    } else {
    }
    return
  }
  func.func @transform_0(%arg0: i32, %arg1: i32) -> (i32, i32) {
    %c1_i32 = arith.constant 1 : i32
    %0 = arith.muli %arg0, %c1_i32 : i32
    %1 = arith.addi %0, %arg1 : i32
    %c0_i32 = arith.constant 0 : i32
    %c0_i32_0 = arith.constant 0 : i32
    return %1, %c0_i32 : i32, i32
  }
  func.func @transform_1(%arg0: i32, %arg1: i32) -> (i32, i32) {
    %c1_i32 = arith.constant 1 : i32
    %0 = arith.muli %arg0, %c1_i32 : i32
    %1 = arith.addi %0, %arg1 : i32
    %c0_i32 = arith.constant 0 : i32
    %c0_i32_0 = arith.constant 0 : i32
    return %1, %c0_i32 : i32, i32
  }
  func.func @transform_2(%arg0: i32, %arg1: i32) -> (i32, i32) {
    %c0_i32 = arith.constant 0 : i32
    %c0_i32_0 = arith.constant 0 : i32
    %c0_i32_1 = arith.constant 0 : i32
    return %c0_i32, %c0_i32_0 : i32, i32
  }
  func.func @transform_3(%arg0: i32, %arg1: i32) -> (i32, i32, i32) {
    %c0_i32 = arith.constant 0 : i32
    %c0_i32_0 = arith.constant 0 : i32
    %c0_i32_1 = arith.constant 0 : i32
    return %arg0, %c0_i32, %c0_i32_0 : i32, i32, i32
  }
}

</mosaic_0001>

<llo_original>
// kernel: tpu_custom_call.1
$region0: #{tpu_custom_call.1}
  #allocation0 [shape = 'u32[]', space=smem, size = 0x4, offset = 0x4, fixed_abs, tag = 'smem constant byte address 0x4 - core index']
  #allocation1 [shape = 'u32[144,128]{1,0:T(1,128)}', space=vmem, size = 0x12000, scoped, tag = 'internal scratch']
  #allocation2 [shape = 'f32[1,1,1]{2,1,0:T(1,128)}', space=vmem, size = 0x200, scoped, tag = 'scratch operand']
  %s0 = inlined_call_operand.vmem [shape: f32[8,16], index: 0, kind: input, shape index: {}]
  %s1 = inlined_call_operand.vmem [shape: s32[8,1], index: 1, kind: input, shape index: {}]
  %s2 = inlined_call_operand.hbm [shape: f32[16,16], index: 2, kind: input, shape index: {}]
  %s3 = inlined_call_operand.hbm [shape: f32[1,1,1], index: 3, kind: output, shape index: {}]
  %s4 = sld [smem:[#allocation0]]
  $region34: #{tpu_custom_call.1} parent=0
    _
  %s6 = ssub.s32 1, %s4
  %s7 = scalar_select 0, %s6, %s4
  $region1: #{tpu_custom_call.1} parent=0
    #allocation3 [shape = 'u8[8192]{0}', space=vmem, size = 0x2000, scoped, tag = 'input window, operand 2, single buffered']
    #allocation4 [shape = 's32[1]{0}', space=sflag, size = 0x4, scoped, tag = 'scoped memory for tpu_custom_call.1']
    #allocation5 [shape = 's32[1]{0}', space=sflag, size = 0x4, scoped, tag = 'scoped memory for tpu_custom_call.1']
    #allocation6 [shape = 'u8[512]{0}', space=vmem, size = 0x400, scoped, tag = 'output window, operand 0, single buffered']
    %8 = vsyncpa [#allocation4], 0
    %9 = vsyncpa [#allocation5], 0
    // Predicated region
    $region2: #{tpu_custom_call.1} parent=1 // pred_check
      _
    $region3: #{tpu_custom_call.1} parent=1 // pred_check_branch
      %11 = sbr.rel (0) target = $region5
    $region4: #{tpu_custom_call.1} parent=1 // pred_region
      %s12 = sadd.s32 0, 0
      %p13 = scmp.lt.s32.totalorder %s12, 0
      %s14 = scalar_select %p13, %s12, 0
      %s15 = smul.addr %s14, 8
      %s16 = scalar_lea.vmem %s0, %s15
      %s17 = sadd.s32 0, 0
    $region5: #{tpu_custom_call.1} parent=1 // pred_fallthru
      _
    // Predicated region
    $region6: #{tpu_custom_call.1} parent=1 // pred_check
      _
    $region7: #{tpu_custom_call.1} parent=1 // pred_check_branch
      %19 = sbr.rel (0) target = $region9
    $region8: #{tpu_custom_call.1} parent=1 // pred_region
      %s20 = sadd.s32 0, 0
      %p21 = scmp.lt.s32.totalorder %s20, 0
      %s22 = scalar_select %p21, %s20, 0
      %s23 = smul.addr %s22, 8
      %s24 = scalar_lea.vmem %s1, %s23
      %s25 = sadd.s32 0, 0
    $region9: #{tpu_custom_call.1} parent=1 // pred_fallthru
      _
    // Predicated region
    $region10: #{tpu_custom_call.1} parent=1 // pred_check
      _
    $region11: #{tpu_custom_call.1} parent=1 // pred_check_branch
      %27 = sbr.rel (0) target = $region13
    $region12: #{tpu_custom_call.1} parent=1 // pred_region
      %s29 = ssub.s32 256, 256
      %30 = vsyncadd [#allocation4], %s29
      %s31 = sshll.u32 [#allocation3], 4
      %s32 = int_to_ptr.vmem [resolvable:$true] %s31
      %37 = dma.hbm_to_vmem [thread:$0]  %s2, 256, %s32, [#allocation4], 128, 128, 8
    $region13: #{tpu_custom_call.1} parent=1 // pred_fallthru
      _
    // Predicated region
    $region14: #{tpu_custom_call.1} parent=1 // pred_check
      _
    $region15: #{tpu_custom_call.1} parent=1 // pred_check_branch
      %39 = sbr.rel (0) target = $region17
    $region16: #{tpu_custom_call.1} parent=1 // pred_region
      %40 = dma.done [#allocation4], 256
    $region17: #{tpu_custom_call.1} parent=1 // pred_fallthru
      _
    %s41 = sadd.s32 0, 0
    %p42 = scmp.lt.s32.totalorder %s41, 0
    %s43 = scalar_select %p42, %s41, 0
    %s44 = smul.addr %s43, 8
    %s45 = scalar_lea.vmem %s0, %s44
    %s46 = sadd.s32 0, 0
    %p47 = scmp.lt.s32.totalorder %s46, 0
    %s48 = scalar_select %p47, %s46, 0
    %s49 = smul.addr %s48, 8
    %s50 = scalar_lea.vmem %s1, %s49
    %s51 = sadd.s32 0, 0
    %p52 = scmp.lt.s32.totalorder %s51, 0
    %s53 = scalar_select %p52, %s51, 0
    %s54 = smul.addr %s53, 8
    %s55 = scalar_lea.vmem %s0, %s54
    %s56 = sadd.s32 0, 0
    %s57 = sadd.s32 0, 0
    %p58 = scmp.lt.s32.totalorder %s57, 0
    %s59 = scalar_select %p58, %s57, 0
    %s60 = smul.addr %s59, 8
    %s61 = scalar_lea.vmem %s1, %s60
    %s62 = sadd.s32 0, 0
    %p63 = scmp.eq.s32.totalorder 0, 0
    // Predicated region
    $region18: #{tpu_custom_call.1} parent=1 // pred_check
      %p64 = pneg %p63
    $region19: #{tpu_custom_call.1} parent=1 // pred_check_branch
      %66 = sbr.rel (%p64) target = $region21
    $region20: #{tpu_custom_call.1} parent=1 // pred_region
      %vm67 = vcmask 0
      %68 = vst.msk [vmem:[#allocation2] sm:$0x1] %vm67, 0.0
    $region21: #{tpu_custom_call.1} parent=1 // pred_fallthru
      _
    %v69 = vld [vmem:[%s55] sm:$0xff]
    %v70 = vld [vmem:[%s61] sm:$0xff]
    %v71 = vlaneseq
    %v72 = vand.u32 %v71, 127
    %73 = vset.pattern.permute.xlu0 0
    %74 = vperm.xlu0 %73, %v70
    %v75 = vpop.permute.xlu0 %74
    %vm76 = vcmp.eq.s32.totalorder %v72, %v75
    %vm77 = vcmask 130048
    %v78 = vsel %vm77, %v69, -inf
    %79 = vmax.xlane.f32.xlu0 %v78
    %v80 = vpop.xlane.xlu0 %79
    %v81 = vsub.f32 %v69, %v80
    %v82 = vmul.f32 %v81, 1.442695
    %v83 = vpow.pop %v82
    %v84 = vsel %vm77, %v83, 0.0
    %85 = vadd.xlane.f32.xlu0 %v84
    %v86 = vpop.xlane.xlu0 %85
    %v87 = vsel %vm76, %v69, 0.0
    %v88 = vsel %vm77, %v87, 0.0
    %89 = vadd.xlane.f32.xlu0 %v88
    %v90 = vpop.xlane.xlu0 %89
    %v91 = vsub.f32 %v90, %v80
    %v92 = vlog2.pop %v86
    %v93 = vmul.f32 %v92, 0.6931472
    %v94 = vsub.f32 %v91, %v93
    %v95 = vmul.f32 %v94, 1.442695
    %v96 = vpow.pop %v95
    %vm97 = vcmp.eq.f32.partialorder %v69, %v80
    %v98 = vsel %vm97, %v72, 16
    %v99 = vsel %vm77, %v98, 2147483647
    %v100 = vand.u32 %v99, 65535
    %v101 = vshra.s32 %v99, 16
    %v102 = vcvt.s32.f32 %v100
    %v103 = vcvt.s32.f32 %v101
    %104 = vmin.xlane.f32.xlu0 %v103
    %v105 = vpop.xlane.xlu0 %104
    %vm106 = vcmp.eq.f32.partialorder %v103, %v105
    %v107 = vsel %vm106, %v102, inf
    %108 = vmin.xlane.f32.xlu0 %v107
    %v109 = vpop.xlane.xlu0 %108
    %v110 = vcvt.f32.s32 %v109
    %v111 = vcvt.f32.s32 %v105
    %v112 = vshll.u32 %v111, 16
    %v113 = vadd.s32 %v112, %v110
    %v114 = vsel %vm76, 1, 0
    %v115 = vcvt.s32.f32 %v114
    %v116 = vld [vmem:[#allocation3] sm:$0xff]
    %v117 = vld [vmem:[#allocation3 + $0x8] sm:$0xff]
    %v119 = vsel %vm77, %v115, 0
    %121 = vmatprep.subr.mxu0 0.0
    %122 = vmatpush1.msra.mxu0 0.0
    %123 = vmatprep.subr.mxu0 0.0
    %124 = vmatpush1.msra.mxu0 0.0
    %125 = vmatprep.subr.mxu0 0.0
    %126 = vmatpush1.msra.mxu0 0.0
    %127 = vmatprep.subr.mxu0 0.0
    %128 = vmatpush1.msra.mxu0 0.0
    %129 = vmatprep.subr.mxu0 0.0
    %130 = vmatpush1.msra.mxu0 0.0
    %131 = vmatprep.subr.mxu0 0.0
    %132 = vmatpush1.msra.mxu0 0.0
    %133 = vmatprep.subr.mxu0 0.0
    %134 = vmatpush1.msra.mxu0 0.0
    %135 = vmatprep.subr.mxu0 0.0
    %136 = vmatpush1.msra.mxu0 0.0
    %137 = vmatprep.subr.mxu0 0.0
    %138 = vmatpush1.msra.mxu0 0.0
    %139 = vmatprep.subr.mxu0 0.0
    %140 = vmatpush1.msra.mxu0 0.0
    %141 = vmatprep.subr.mxu0 0.0
    %142 = vmatpush1.msra.mxu0 0.0
    %143 = vmatprep.subr.mxu0 0.0
    %144 = vmatpush1.msra.mxu0 0.0
    %145 = vmatprep.subr.mxu0 0.0
    %146 = vmatpush1.msra.mxu0 0.0
    %147 = vmatprep.subr.mxu0 0.0
    %148 = vmatpush1.msra.mxu0 0.0
    %149 = vmatprep.subr.mxu0 0.0
    %150 = vmatpush1.msra.mxu0 %v117
    %151 = vmatprep.subr.mxu0 0.0
    %152 = vmatpush1.msra.mxu0 %v116
    %153 = vmatprep.subr.mxu0 0.0
    %154 = vmatpush2.msra.mxu0 0.0
    %155 = vmatprep.subr.mxu0 0.0
    %156 = vmatpush2.msra.mxu0 0.0
    %157 = vmatprep.subr.mxu0 0.0
    %158 = vmatpush2.msra.mxu0 0.0
    %159 = vmatprep.subr.mxu0 0.0
    %160 = vmatpush2.msra.mxu0 0.0
    %161 = vmatprep.subr.mxu0 0.0
    %162 = vmatpush2.msra.mxu0 0.0
    %163 = vmatprep.subr.mxu0 0.0
    %164 = vmatpush2.msra.mxu0 0.0
    %165 = vmatprep.subr.mxu0 0.0
    %166 = vmatpush2.msra.mxu0 0.0
    %167 = vmatprep.subr.mxu0 0.0
    %168 = vmatpush2.msra.mxu0 0.0
    %169 = vmatprep.subr.mxu0 0.0
    %170 = vmatpush2.msra.mxu0 0.0
    %171 = vmatprep.subr.mxu0 0.0
    %172 = vmatpush2.msra.mxu0 0.0
    %173 = vmatprep.subr.mxu0 0.0
    %174 = vmatpush2.msra.mxu0 0.0
    %175 = vmatprep.subr.mxu0 0.0
    %176 = vmatpush2.msra.mxu0 0.0
    %177 = vmatprep.subr.mxu0 0.0
    %178 = vmatpush2.msra.mxu0 0.0
    %179 = vmatprep.subr.mxu0 0.0
    %180 = vmatpush2.msra.mxu0 0.0
    %181 = vmatprep.subr.mxu0 0.0
    %182 = vmatpush2.msra.mxu0 0.0
    %183 = vmatprep.subr.mxu0 0.0
    %184 = vmatpush2.msra.mxu0 0.0
    %185 = vmatprep.mubr.f32.mxu0 0.0
    %186 = vmatmul.mubr.f32.gmra.mxu0 %v119
    %v187 = vpop.f32.mrf.mxu0
    %v188 = vadd.f32 0.0, %v187
    %v189 = vpop.f32.mrf.mxu0
    %190 = vdwg.mxu0
    %vm191 = vcmp.eq.s32.totalorder %v72, %v113
    %v192 = vsel %vm191, %v188, 0.0
    %v193 = vsel %vm77, %v192, 0.0
    %194 = vadd.xlane.f32.xlu0 %v193
    %v195 = vpop.xlane.xlu0 %194
    %v196 = vsub.f32 1.0, %v96
    %v197 = vmul.f32 %v196, %v196
    %v198 = vmul.f32 %v195, %v197
    %v199 = vmul.f32 %v198, %v94
    %v200 = vsub.f32 0.0, %v199
    %v201 = vld [vmem:[#allocation2] sm:$0x1]
    %vm202 = vcmask 7168
    %v203 = vsel %vm202, %v200, 0.0
    %204 = vadd.xlane.f32.xlu0 %v203
    %v205 = vpop.xlane.xlu0 %204
    %v206 = vrot.slane %v205, 4
    %v207 = vadd.f32 %v205, %v206
    %v208 = vrot.slane %v207, 2
    %v209 = vadd.f32 %v207, %v208
    %v210 = vrot.slane %v209, 1
    %v211 = vadd.f32 %v209, %v210
    %s212 = vtos %v211
    %v213 = vstv %s212
    %v214 = vadd.f32 %v201, %v213
    %vm215 = vcmask 0
    %216 = vst.msk [vmem:[#allocation2] sm:$0x1] %vm215, %v214
    // Predicated region
    $region22: #{tpu_custom_call.1} parent=1 // pred_check
      %p217 = pneg %p63
    $region23: #{tpu_custom_call.1} parent=1 // pred_check_branch
      %219 = sbr.rel (%p217) target = $region25
    $region24: #{tpu_custom_call.1} parent=1 // pred_region
      %v220 = vld [vmem:[#allocation2] sm:$0x1]
      %221 = vst.msk [vmem:[#allocation6] sm:$0x1] %vm215, %v220
    $region25: #{tpu_custom_call.1} parent=1 // pred_fallthru
      _
    // Predicated region
    $region26: #{tpu_custom_call.1} parent=1 // pred_check
      _
    $region27: #{tpu_custom_call.1} parent=1 // pred_check_branch
      %223 = sbr.rel (0) target = $region29
    $region28: #{tpu_custom_call.1} parent=1 // pred_region
      %s225 = ssub.s32 16, 16
      %226 = vsyncadd [#allocation5], %s225
      %s228 = sshll.u32 [#allocation6], 4
      %s229 = int_to_ptr.vmem [resolvable:$true] %s228
      %231 = dma.vmem_to_hbm [thread:$0]  %s229, 16, %s3, [#allocation5]
    $region29: #{tpu_custom_call.1} parent=1 // pred_fallthru
      _
    // Predicated region
    $region30: #{tpu_custom_call.1} parent=1 // pred_check
      _
    $region31: #{tpu_custom_call.1} parent=1 // pred_check_branch
      %233 = sbr.rel (0) target = $region33
    $region32: #{tpu_custom_call.1} parent=1 // pred_region
      %234 = dma.done [#allocation5], 16
    $region33: #{tpu_custom_call.1} parent=1 // pred_fallthru
      _
    %235 = vsyncpa [#allocation4], 1
    %236 = vsyncpa [#allocation5], 1

</llo_original>
